<compile_context>
chip_gen: v7x
topology: tpu7x:2x2x1
jax: 0.10.0
libtpu: 0.0.40
codegen_flags: <defaults>
</compile_context>

<pallas_src>
from typing import NamedTuple

import jax
import jax.numpy as jnp
from jax.experimental import pallas as pl
from jax.experimental.pallas import tpu as pltpu

NUM_OPS = 5
LEAKY_SLOPE = 0.2


def _round_up(v, m):
    return (v + m - 1) // m * m


# -----------------------------------------------------------------------------
# Kernels
# -----------------------------------------------------------------------------
def _weighted_act_sum(load_y, wsm_ref):
    """Weighted sum of the 5 activations.

    load_y(k) -> (tm, tn) f32 pre-activation of op k; callers pass a ref-sliced
    load so only one tn-wide slab is live at a time (low vreg pressure).
    """
    y = load_y(0)                                              # ReLU
    out = wsm_ref[0, 0] * jnp.maximum(y, 0.0)
    y = load_y(1)                                              # Tanh (EUP)
    out = out + wsm_ref[0, 1] * jnp.tanh(y)
    y = load_y(2)                                              # Sigmoid (exact, one EUP op)
    out = out + wsm_ref[0, 2] * (0.5 * (jnp.tanh(0.5 * y) + 1.0))
    y = load_y(3)                                              # LeakyReLU(0.2)
    out = out + wsm_ref[0, 3] * jnp.where(y >= 0.0, y, LEAKY_SLOPE * y)
    y = load_y(4)                                              # identity (bare Linear)
    out = out + wsm_ref[0, 4] * y
    return out


def mixed_op_kernel_multik(wsm_ref, x_ref, w_ref, b_ref, o_ref, acc_ref):
    """K-tiled path.

    wsm_ref : SMEM (1, 5) f32        softmax(alpha) mixing weights
    x_ref   : VMEM (tm, tk)          input tile (bf16)
    w_ref   : VMEM (tk, 5*tn)        packed weight tile (all 5 ops, same N slice)
    b_ref   : VMEM (1, 5*tn) f32     packed bias tile
    o_ref   : VMEM (tm, tn)          output tile
    acc_ref : VMEM (tm, 5*tn) f32    accumulator scratch (lives across K steps)
    """
    kk = pl.program_id(2)

    @pl.when(kk == 0)
    def _():
        # Fold the bias into the (already mandatory) accumulator init.
        acc_ref[...] = jnp.broadcast_to(b_ref[...], acc_ref.shape)

    # One fused lane-dense MXU call per grid step (bf16 operands, f32 accumulate).
    acc_ref[...] += jnp.dot(x_ref[...], w_ref[...],
                            preferred_element_type=jnp.float32)

    @pl.when(kk == pl.num_programs(2) - 1)
    def _():
        tn = o_ref.shape[1]
        out = _weighted_act_sum(
            lambda k: acc_ref[:, k * tn:(k + 1) * tn], wsm_ref)
        o_ref[...] = out.astype(o_ref.dtype)


def mixed_op_kernel_singlek(wsm_ref, x_ref, w_ref, b_ref, o_ref):
    """Full-K fast path (grid K == 1): no accumulator scratch, no VMEM
    store-then-reload round trip of the (tm, 5*tn) f32 accumulator."""
    tn = o_ref.shape[1]
    acc = jnp.dot(x_ref[...], w_ref[...], preferred_element_type=jnp.float32)
    out = _weighted_act_sum(
        lambda k: acc[:, k * tn:(k + 1) * tn] + b_ref[:, k * tn:(k + 1) * tn],
        wsm_ref)
    o_ref[...] = out.astype(o_ref.dtype)


# -----------------------------------------------------------------------------
# Tiling plan / parameter packing (packing runs once, at parameter-prep time)
# -----------------------------------------------------------------------------
class MixedOpPlan(NamedTuple):
    B: int
    Din: int
    Dout: int
    B_p: int
    Din_p: int
    Dout_p: int
    tm: int
    tn: int
    tk: int
    n_tn: int
    n_k: int


def plan_mixed_op(B, Din, Dout, *, tm_max=512, tk_max=512, tn_max=256):
    """Tile sizes budgeted for all generations: with bf16 operands the per-step
    working set (x/W/out double buffers + f32 acc) is ~7 MiB at the maxima,
    under v5e's 16 MiB default scoped VMEM and well under v7x's 64 MiB."""
    assert tn_max % 128 == 0 and tk_max % 128 == 0

    # Lane-dense output: Dout padded to a multiple of 128 (unmasked vst).
    Dout_p = _round_up(Dout, 128)
    tn = tn_max if Dout_p % tn_max == 0 else 128
    n_tn = Dout_p // tn

    # K tiling: full K when it fits one tile, else 128-aligned tiles (caps the
    # padding waste instead of padding Din up to a multiple of tk_max).
    if Din <= tk_max:
        Din_p = _round_up(Din, 8)          # clean sublane count for the W block
        tk = Din_p
    else:
        din128 = _round_up(Din, 128)
        nk = pl.cdiv(din128, tk_max)
        tk = _round_up(pl.cdiv(din128, nk), 128)
        Din_p = nk * tk
    n_k = Din_p // tk

    # Batch tiling: big tm amortizes re-streaming of the packed W (whose
    # index_map ignores the M index), but keep >=2 blocks along a "parallel"
    # grid axis when possible so both v7x TensorCores get work.
    tm = min(_round_up(B, 8), tm_max)
    B_p = _round_up(B, tm)
    if (B_p // tm) * n_tn < 2 and B >= 16:
        tm = max(8, _round_up(pl.cdiv(B, 2), 8))
        B_p = _round_up(B, tm)

    return MixedOpPlan(B, Din, Dout, B_p, Din_p, Dout_p, tm, tn, tk, n_tn, n_k)


def pack_mixed_op_params(w_all, b_all, plan, *, mxu_dtype=jnp.bfloat16):
    """Pack the 5 Linear layers once (only alpha changes per NAS step).

    w_all: (5, Din, Dout) pre-transposed Linear weights (kernel computes x @ W + b)
    b_all: (5, Dout)
    Returns:
      w_cat: (Din_p, n_tn*5*tn) in mxu_dtype — N-tile j holds output columns
             [j*tn, (j+1)*tn) of ALL five ops back-to-back: col = (j*5 + op)*tn + c.
      b_cat: (1, n_tn*5*tn) f32 (bias stays in the f32 accumulate path).
    """
    p = plan
    w_p = jnp.pad(w_all.astype(mxu_dtype),
                  ((0, 0), (0, p.Din_p - p.Din), (0, p.Dout_p - p.Dout)))
    w_cat = (w_p.reshape(NUM_OPS, p.Din_p, p.n_tn, p.tn)
                 .transpose(1, 2, 0, 3)
                 .reshape(p.Din_p, p.n_tn * NUM_OPS * p.tn))
    b_p = jnp.pad(b_all.astype(jnp.float32), ((0, 0), (0, p.Dout_p - p.Dout)))
    b_cat = (b_p.reshape(NUM_OPS, p.n_tn, p.tn)
                 .transpose(1, 0, 2)
                 .reshape(1, p.n_tn * NUM_OPS * p.tn))
    return w_cat, b_cat


# -----------------------------------------------------------------------------
# Forward
# -----------------------------------------------------------------------------
def mixed_op_packed(x, alpha, w_cat, b_cat, plan, *,
                    mxu_dtype=jnp.bfloat16, out_dtype=None):
    """Per-step forward: x (B, Din), alpha (5,), pre-packed params."""
    p = plan
    B, Din = x.shape
    assert (B, Din) == (p.B, p.Din), "plan was built for a different shape"
    if out_dtype is None:
        out_dtype = x.dtype

    # Tiny softmax over 5 scalars: glue, plain JAX; lands in SMEM.
    wsm = jax.nn.softmax(alpha.astype(jnp.float32), axis=-1).reshape(1, NUM_OPS)
    x_p = jnp.pad(x.astype(mxu_dtype), ((0, p.B_p - B), (0, p.Din_p - Din)))

    smem_spec = pl.BlockSpec(memory_space=pltpu.MemorySpace.SMEM)
    ntn = NUM_OPS * p.tn

    if p.n_k == 1:
        # Single-K fast path (the common NAS-cell case): no accumulator scratch.
        out_p = pl.pallas_call(
            mixed_op_kernel_singlek,
            out_shape=jax.ShapeDtypeStruct((p.B_p, p.Dout_p), out_dtype),
            grid=(p.B_p // p.tm, p.n_tn),
            in_specs=[
                smem_spec,                                               # wsm
                pl.BlockSpec((p.tm, p.tk), lambda i, j: (i, 0)),         # x
                # TODO(synk): sweep pipeline_mode=pl.Buffered(3) on this heavy,
                # non-reused W stream on v6e if its DMA shows up exposed.
                pl.BlockSpec((p.tk, ntn), lambda i, j: (0, j)),          # packed W
                pl.BlockSpec((1, ntn), lambda i, j: (0, j)),             # packed b
            ],
            out_specs=pl.BlockSpec((p.tm, p.tn), lambda i, j: (i, j)),
            compiler_params=pltpu.CompilerParams(
                dimension_semantics=("parallel", "parallel")),
        )(wsm, x_p, w_cat, b_cat)
    else:
        out_p = pl.pallas_call(
            mixed_op_kernel_multik,
            out_shape=jax.ShapeDtypeStruct((p.B_p, p.Dout_p), out_dtype),
            grid=(p.B_p // p.tm, p.n_tn, p.n_k),                         # K last
            in_specs=[
                smem_spec,                                               # wsm
                pl.BlockSpec((p.tm, p.tk), lambda i, j, kk: (i, kk)),    # x
                pl.BlockSpec((p.tk, ntn), lambda i, j, kk: (kk, j)),     # packed W
                pl.BlockSpec((1, ntn), lambda i, j, kk: (0, j)),         # packed b
            ],
            out_specs=pl.BlockSpec((p.tm, p.tn), lambda i, j, kk: (i, j)),
            scratch_shapes=[pltpu.VMEM((p.tm, ntn), jnp.float32)],
            compiler_params=pltpu.CompilerParams(
                dimension_semantics=("parallel", "parallel", "arbitrary")),
        )(wsm, x_p, w_cat, b_cat)

    return out_p[:B, :p.Dout]


def mixed_op(x, w_all, b_all, alpha, *, mxu_dtype=jnp.bfloat16):
    """One-shot convenience. For repeated forwards, call plan_mixed_op +
    pack_mixed_op_params once and use mixed_op_packed per step."""
    plan = plan_mixed_op(x.shape[0], x.shape[1], w_all.shape[-1])
    w_cat, b_cat = pack_mixed_op_params(w_all, b_all, plan, mxu_dtype=mxu_dtype)
    return mixed_op_packed(x, alpha, w_cat, b_cat, plan,
                           mxu_dtype=mxu_dtype, out_dtype=x.dtype)


# -----------------------------------------------------------------------------
# Reference (mirrors the PyTorch forward, pure f32)
# -----------------------------------------------------------------------------
def mixed_op_ref(x, w_all, b_all, alpha):
    wsm = jax.nn.softmax(alpha.astype(jnp.float32), axis=-1)
    xf = x.astype(jnp.float32)
    acts = [
        lambda y: jnp.maximum(y, 0.0),
        jnp.tanh,
        jax.nn.sigmoid,
        lambda y: jnp.where(y >= 0.0, y, LEAKY_SLOPE * y),
        lambda y: y,
    ]
    out = 0.0
    for k in range(NUM_OPS):
        y = xf @ w_all[k].astype(jnp.float32) + b_all[k].astype(jnp.float32)
        out = out + wsm[k] * acts[k](y)
    return out.astype(x.dtype)


if __name__ == "__main__":
    key = jax.random.PRNGKey(0)
    B, in_dim, out_dim = 8, 32, 32

    kx, kw, kb = jax.random.split(key, 3)
    x = jax.random.normal(kx, (B, in_dim), dtype=jnp.float32)
    # Params mirroring the 5 nn.Linear layers, stored pre-transposed as
    # (op, in_dim, out_dim) so the kernel computes x @ W + b directly.
    w_all = jax.random.normal(kw, (NUM_OPS, in_dim, out_dim), dtype=jnp.float32) * 0.1
    b_all = jax.random.normal(kb, (NUM_OPS, out_dim), dtype=jnp.float32) * 0.1
    # nn.Parameter(torch.zeros(5)) -> softmax gives uniform 0.2 mixing weights.
    alpha = jnp.zeros((NUM_OPS,), dtype=jnp.float32)

    # Pack once at parameter-prep time; the per-step forward takes only (x, alpha).
    plan = plan_mixed_op(B, in_dim, out_dim)
    w_cat, b_cat = pack_mixed_op_params(w_all, b_all, plan, mxu_dtype=jnp.bfloat16)
    fwd = jax.jit(lambda xx, a, wc, bc: mixed_op_packed(
        xx, a, wc, bc, plan, mxu_dtype=jnp.bfloat16, out_dtype=xx.dtype))

    out = fwd(x, alpha, w_cat, b_cat)
    jax.block_until_ready(out)
    assert out.shape == (B, out_dim)

    # Reference in f32. The kernel feeds the MXU bf16 operands (f32 accumulate),
    # so allow bf16-rounding-sized error; the sigmoid path is exact
    # (0.5*(tanh(0.5y)+1)), no approximate reciprocal anymore.
    ref = mixed_op_ref(x, w_all, b_all, alpha)
    err = float(jnp.max(jnp.abs(out.astype(jnp.float32) - ref.astype(jnp.float32))))
    assert err < 2e-2, f"mismatch vs reference: max abs err = {err}"
    print("KERNEL_OK")
</pallas_src>

<mosaic_0001>
module attributes {stable_mosaic.version = 11 : i64} {
  func.func @mixed_op_kernel_singlek(%arg0: i32, %arg1: i32, %arg2: memref<1x5xf32, #tpu.memory_space<smem>>, %arg3: memref<8x32xbf16, #tpu.memory_space<vmem>>, %arg4: memref<32x640xbf16, #tpu.memory_space<vmem>>, %arg5: memref<1x640xf32, #tpu.memory_space<vmem>>, %arg6: memref<8x128xf32, #tpu.memory_space<vmem>>) attributes {dimension_semantics = [#tpu.dimension_semantics<parallel>, #tpu.dimension_semantics<parallel>], iteration_bounds = array<i64: 1, 1>, scalar_prefetch = 0 : i64, scratch_operands = 0 : i64, tpu.core_type = #tpu.core_type<tc>, window_params = [{transform_indices = @transform_0, window_bounds = array<i64: 1, 5>}, {transform_indices = @transform_1, window_bounds = array<i64: 8, 32>}, {transform_indices = @transform_2, window_bounds = array<i64: 32, 640>}, {transform_indices = @transform_3, window_bounds = array<i64: 1, 640>}, {transform_indices = @transform_4, window_bounds = array<i64: 8, 128>}]} {
    %c0 = arith.constant 0 : index
    %c0_0 = arith.constant 0 : index
    %0 = vector.load %arg3[%c0, %c0_0] : memref<8x32xbf16, #tpu.memory_space<vmem>>, vector<8x32xbf16>
    %c0_1 = arith.constant 0 : index
    %c0_2 = arith.constant 0 : index
    %1 = vector.load %arg4[%c0_1, %c0_2] : memref<32x640xbf16, #tpu.memory_space<vmem>>, vector<32x640xbf16>
    %cst = arith.constant dense<0.000000e+00> : vector<8x640xf32>
    %2 = tpu.matmul %0, %1, %cst {dimension_numbers = #tpu.dot_dimension_numbers<[1], [0], [0], [1], [0, 0, 1, 1], [], []>} : vector<8x32xbf16>, vector<32x640xbf16>, vector<8x640xf32> -> vector<8x640xf32>
    %3 = vector.extract_strided_slice %2 {offsets = [0, 0], sizes = [8, 128], strides = [1, 1]} : vector<8x640xf32> to vector<8x128xf32>
    %c0_3 = arith.constant 0 : index
    %c0_4 = arith.constant 0 : index
    %4 = vector.load %arg5[%c0_3, %c0_4] : memref<1x640xf32, #tpu.memory_space<vmem>>, vector<1x128xf32>
    %5 = vector.broadcast %4 : vector<1x128xf32> to vector<8x128xf32>
    %6 = arith.addf %3, %5 : vector<8x128xf32>
    %c0_5 = arith.constant 0 : index
    %c0_6 = arith.constant 0 : index
    %7 = memref.load %arg2[%c0_5, %c0_6] : memref<1x5xf32, #tpu.memory_space<smem>>
    %cst_7 = arith.constant 0.000000e+00 : f32
    %8 = vector.broadcast %cst_7 : f32 to vector<8x128xf32>
    %9 = arith.maximumf %6, %8 : vector<8x128xf32>
    %10 = vector.broadcast %7 : f32 to vector<8x128xf32>
    %11 = arith.mulf %10, %9 : vector<8x128xf32>
    %12 = vector.extract_strided_slice %2 {offsets = [0, 128], sizes = [8, 128], strides = [1, 1]} : vector<8x640xf32> to vector<8x128xf32>
    %c0_8 = arith.constant 0 : index
    %c128 = arith.constant 128 : index
    %13 = vector.load %arg5[%c0_8, %c128] : memref<1x640xf32, #tpu.memory_space<vmem>>, vector<1x128xf32>
    %14 = vector.broadcast %13 : vector<1x128xf32> to vector<8x128xf32>
    %15 = arith.addf %12, %14 : vector<8x128xf32>
    %c0_9 = arith.constant 0 : index
    %c1 = arith.constant 1 : index
    %16 = memref.load %arg2[%c0_9, %c1] : memref<1x5xf32, #tpu.memory_space<smem>>
    %17 = math.tanh %15 : vector<8x128xf32>
    %18 = vector.broadcast %16 : f32 to vector<8x128xf32>
    %19 = arith.mulf %18, %17 : vector<8x128xf32>
    %20 = arith.addf %11, %19 : vector<8x128xf32>
    %21 = vector.extract_strided_slice %2 {offsets = [0, 256], sizes = [8, 128], strides = [1, 1]} : vector<8x640xf32> to vector<8x128xf32>
    %c0_10 = arith.constant 0 : index
    %c256 = arith.constant 256 : index
    %22 = vector.load %arg5[%c0_10, %c256] : memref<1x640xf32, #tpu.memory_space<vmem>>, vector<1x128xf32>
    %23 = vector.broadcast %22 : vector<1x128xf32> to vector<8x128xf32>
    %24 = arith.addf %21, %23 : vector<8x128xf32>
    %c0_11 = arith.constant 0 : index
    %c2 = arith.constant 2 : index
    %25 = memref.load %arg2[%c0_11, %c2] : memref<1x5xf32, #tpu.memory_space<smem>>
    %cst_12 = arith.constant 5.000000e-01 : f32
    %26 = vector.broadcast %cst_12 : f32 to vector<8x128xf32>
    %27 = arith.mulf %26, %24 : vector<8x128xf32>
    %28 = math.tanh %27 : vector<8x128xf32>
    %cst_13 = arith.constant 1.000000e+00 : f32
    %29 = vector.broadcast %cst_13 : f32 to vector<8x128xf32>
    %30 = arith.addf %28, %29 : vector<8x128xf32>
    %cst_14 = arith.constant 5.000000e-01 : f32
    %31 = vector.broadcast %cst_14 : f32 to vector<8x128xf32>
    %32 = arith.mulf %31, %30 : vector<8x128xf32>
    %33 = vector.broadcast %25 : f32 to vector<8x128xf32>
    %34 = arith.mulf %33, %32 : vector<8x128xf32>
    %35 = arith.addf %20, %34 : vector<8x128xf32>
    %36 = vector.extract_strided_slice %2 {offsets = [0, 384], sizes = [8, 128], strides = [1, 1]} : vector<8x640xf32> to vector<8x128xf32>
    %c0_15 = arith.constant 0 : index
    %c384 = arith.constant 384 : index
    %37 = vector.load %arg5[%c0_15, %c384] : memref<1x640xf32, #tpu.memory_space<vmem>>, vector<1x128xf32>
    %38 = vector.broadcast %37 : vector<1x128xf32> to vector<8x128xf32>
    %39 = arith.addf %36, %38 : vector<8x128xf32>
    %c0_16 = arith.constant 0 : index
    %c3 = arith.constant 3 : index
    %40 = memref.load %arg2[%c0_16, %c3] : memref<1x5xf32, #tpu.memory_space<smem>>
    %cst_17 = arith.constant 0.000000e+00 : f32
    %41 = vector.broadcast %cst_17 : f32 to vector<8x128xf32>
    %42 = arith.cmpf oge, %39, %41 : vector<8x128xf32>
    %cst_18 = arith.constant 2.000000e-01 : f32
    %43 = vector.broadcast %cst_18 : f32 to vector<8x128xf32>
    %44 = arith.mulf %43, %39 : vector<8x128xf32>
    %45 = arith.select %42, %39, %44 : vector<8x128xi1>, vector<8x128xf32>
    %46 = vector.broadcast %40 : f32 to vector<8x128xf32>
    %47 = arith.mulf %46, %45 : vector<8x128xf32>
    %48 = arith.addf %35, %47 : vector<8x128xf32>
    %49 = vector.extract_strided_slice %2 {offsets = [0, 512], sizes = [8, 128], strides = [1, 1]} : vector<8x640xf32> to vector<8x128xf32>
    %c0_19 = arith.constant 0 : index
    %c512 = arith.constant 512 : index
    %50 = vector.load %arg5[%c0_19, %c512] : memref<1x640xf32, #tpu.memory_space<vmem>>, vector<1x128xf32>
    %51 = vector.broadcast %50 : vector<1x128xf32> to vector<8x128xf32>
    %52 = arith.addf %49, %51 : vector<8x128xf32>
    %c0_20 = arith.constant 0 : index
    %c4 = arith.constant 4 : index
    %53 = memref.load %arg2[%c0_20, %c4] : memref<1x5xf32, #tpu.memory_space<smem>>
    %54 = vector.broadcast %53 : f32 to vector<8x128xf32>
    %55 = arith.mulf %54, %52 : vector<8x128xf32>
    %56 = arith.addf %48, %55 : vector<8x128xf32>
    %c0_21 = arith.constant 0 : index
    %c0_22 = arith.constant 0 : index
    %57 = vector.load %arg6[%c0_21, %c0_22] : memref<8x128xf32, #tpu.memory_space<vmem>>, vector<8x128xf32>
    tpu.vector_store %arg6[%c0_21, %c0_22], %56 {strides = array<i32>} : memref<8x128xf32, #tpu.memory_space<vmem>>, vector<8x128xf32>,
    return
  }
  func.func @transform_0(%arg0: i32, %arg1: i32) -> (i32, i32) {
    %c0_i32 = arith.constant 0 : i32
    %c0_i32_0 = arith.constant 0 : i32
    %c0_i32_1 = arith.constant 0 : i32
    return %c0_i32, %c0_i32_0 : i32, i32
  }
  func.func @transform_1(%arg0: i32, %arg1: i32) -> (i32, i32) {
    %c0_i32 = arith.constant 0 : i32
    %c0_i32_0 = arith.constant 0 : i32
    return %arg0, %c0_i32 : i32, i32
  }
  func.func @transform_2(%arg0: i32, %arg1: i32) -> (i32, i32) {
    %c0_i32 = arith.constant 0 : i32
    %c0_i32_0 = arith.constant 0 : i32
    return %c0_i32, %arg1 : i32, i32
  }
  func.func @transform_3(%arg0: i32, %arg1: i32) -> (i32, i32) {
    %c0_i32 = arith.constant 0 : i32
    %c0_i32_0 = arith.constant 0 : i32
    return %c0_i32, %arg1 : i32, i32
  }
  func.func @transform_4(%arg0: i32, %arg1: i32) -> (i32, i32) {
    %c0_i32 = arith.constant 0 : i32
    return %arg0, %arg1 : i32, i32
  }
}

</mosaic_0001>

<llo_original>
// kernel: _lambda_.1
$region0: #{_lambda_.1}
  #allocation0 [shape = 'u32[]', space=smem, size = 0x4, offset = 0x4, fixed_abs, tag = 'smem constant byte address 0x4 - core index']
  #allocation1 [shape = 'u32[144,128]{1,0:T(1,128)}', space=vmem, size = 0x12000, scoped, tag = 'internal scratch']
  %s0 = inlined_call_operand.vmem [shape: f32[1,5], index: 0, kind: input, shape index: {}]
  %s1 = inlined_call_operand.vmem [shape: bf16[8,32], index: 1, kind: input, shape index: {}]
  %s2 = inlined_call_operand.hbm [shape: bf16[32,640], index: 2, kind: input, shape index: {}]
  %s3 = inlined_call_operand.vmem [shape: f32[1,640], index: 3, kind: input, shape index: {}]
  %s4 = inlined_call_operand.hbm [shape: f32[8,128], index: 4, kind: output, shape index: {}]
  %s5 = sld [smem:[#allocation0]]
  $region34: #{_lambda_.1} parent=0
    _
  %s7 = ssub.s32 1, %s5
  %s8 = scalar_select 0, %s7, %s5
  $region1: #{_lambda_.1} parent=0
    #allocation2 [shape = 'u8[512]{0}', space=smem, size = 0x200, scoped, tag = 'input window, operand 0, single buffered']
    #allocation3 [shape = 's32[1]{0}', space=sflag, size = 0x4, scoped, tag = 'scoped memory for _lambda_.1']
    #allocation4 [shape = 's32[1]{0}', space=sflag, size = 0x4, scoped, tag = 'scoped memory for _lambda_.1']
    #allocation5 [shape = 's32[1]{0}', space=sflag, size = 0x4, scoped, tag = 'scoped memory for _lambda_.1']
    #allocation6 [shape = 'u8[40960]{0}', space=vmem, size = 0xa000, scoped, tag = 'input window, operand 2, single buffered']
    #allocation7 [shape = 'u8[4096]{0}', space=vmem, size = 0x1000, scoped, tag = 'output window, operand 0, single buffered']
    %9 = vsyncpa [#allocation5], 0
    %10 = vsyncpa [#allocation3], 0
    %11 = vsyncpa [#allocation4], 0
    // Predicated region
    $region2: #{_lambda_.1} parent=1 // pred_check
      _
    $region3: #{_lambda_.1} parent=1 // pred_check_branch
      %13 = sbr.rel (0) target = $region5
    $region4: #{_lambda_.1} parent=1 // pred_region
      %s15 = ssub.s32 16, 16
      %16 = vsyncadd [#allocation5], %s15
      %s18 = sshll.u32 %s0, 4
      %s19 = int_to_ptr.vmem [resolvable:$true] %s18
      %21 = dma.vmem_to_smem %s19, 16, [#allocation2], [#allocation5]
    $region5: #{_lambda_.1} parent=1 // pred_fallthru
      _
    // Predicated region
    $region6: #{_lambda_.1} parent=1 // pred_check
      _
    $region7: #{_lambda_.1} parent=1 // pred_check_branch
      %23 = sbr.rel (0) target = $region9
    $region8: #{_lambda_.1} parent=1 // pred_region
      _
    $region9: #{_lambda_.1} parent=1 // pred_fallthru
      _
    // Predicated region
    $region10: #{_lambda_.1} parent=1 // pred_check
      _
    $region11: #{_lambda_.1} parent=1 // pred_check_branch
      %25 = sbr.rel (0) target = $region13
    $region12: #{_lambda_.1} parent=1 // pred_region
      %s27 = ssub.s32 1280, 1280
      %28 = vsyncadd [#allocation3], %s27
      %s29 = sshll.u32 [#allocation6], 4
      %s30 = int_to_ptr.vmem [resolvable:$true] %s29
      %35 = dma.hbm_to_vmem [thread:$0]  %s2, 1280, %s30, [#allocation3], 320, 320, 20
    $region13: #{_lambda_.1} parent=1 // pred_fallthru
      _
    // Predicated region
    $region14: #{_lambda_.1} parent=1 // pred_check
      _
    $region15: #{_lambda_.1} parent=1 // pred_check_branch
      %37 = sbr.rel (0) target = $region17
    $region16: #{_lambda_.1} parent=1 // pred_region
      _
    $region17: #{_lambda_.1} parent=1 // pred_fallthru
      _
    // Predicated region
    $region18: #{_lambda_.1} parent=1 // pred_check
      _
    $region19: #{_lambda_.1} parent=1 // pred_check_branch
      %39 = sbr.rel (0) target = $region21
    $region20: #{_lambda_.1} parent=1 // pred_region
      %40 = dma.done [#allocation5], 16
    $region21: #{_lambda_.1} parent=1 // pred_fallthru
      _
    // Predicated region
    $region22: #{_lambda_.1} parent=1 // pred_check
      _
    $region23: #{_lambda_.1} parent=1 // pred_check_branch
      %42 = sbr.rel (0) target = $region25
    $region24: #{_lambda_.1} parent=1 // pred_region
      %43 = dma.done [#allocation3], 1280
    $region25: #{_lambda_.1} parent=1 // pred_fallthru
      _
    %44 = sfence
    %v46 = vld [vmem:[%s1] sm:$0xf]
    %v47 = vld [vmem:[#allocation6] sm:$0xff]
    %v48 = vld [vmem:[#allocation6 + $0x8] sm:$0xff]
    %v49 = vld [vmem:[#allocation6 + $0x10] sm:$0xf]
    %v50 = vld [vmem:[#allocation6 + $0x14] sm:$0xff]
    %v51 = vld [vmem:[#allocation6 + $0x1c] sm:$0xff]
    %v52 = vld [vmem:[#allocation6 + $0x24] sm:$0xf]
    %v53 = vld [vmem:[#allocation6 + $0x28] sm:$0xff]
    %v54 = vld [vmem:[#allocation6 + $0x30] sm:$0xff]
    %v55 = vld [vmem:[#allocation6 + $0x38] sm:$0xf]
    %v56 = vld [vmem:[#allocation6 + $0x3c] sm:$0xff]
    %v57 = vld [vmem:[#allocation6 + $0x44] sm:$0xff]
    %v58 = vld [vmem:[#allocation6 + $0x4c] sm:$0xf]
    %v71 = vunpack.c.l.b16 %v47
    %v72 = vunpack.c.h.b16 %v47
    %v73 = vunpack.c.l.b16 %v48
    %v74 = vunpack.c.h.b16 %v48
    %v75 = vunpack.c.l.b16 %v49
    %v76 = vunpack.c.l.b16 %v50
    %v77 = vunpack.c.h.b16 %v50
    %v78 = vunpack.c.l.b16 %v51
    %v79 = vunpack.c.h.b16 %v51
    %v80 = vunpack.c.l.b16 %v52
    %v81 = vunpack.c.l.b16 %v53
    %v82 = vunpack.c.h.b16 %v53
    %v83 = vunpack.c.l.b16 %v54
    %v84 = vunpack.c.h.b16 %v54
    %v85 = vunpack.c.l.b16 %v55
    %v86 = vunpack.c.l.b16 %v56
    %v87 = vunpack.c.h.b16 %v56
    %v88 = vunpack.c.l.b16 %v57
    %v89 = vunpack.c.h.b16 %v57
    %v90 = vunpack.c.l.b16 %v58
    %v91 = vpack.c.b16 %v76, %v71
    %v92 = vpack.c.b16 %v77, %v72
    %v93 = vpack.c.b16 %v78, %v73
    %v94 = vpack.c.b16 %v79, %v74
    %v95 = vpack.c.b16 %v80, %v75
    %v96 = vpack.c.b16 %v86, %v81
    %v97 = vpack.c.b16 %v87, %v82
    %v98 = vpack.c.b16 %v88, %v83
    %v99 = vpack.c.b16 %v89, %v84
    %v100 = vpack.c.b16 %v90, %v85
    %vm111 = vcmask 261120
    %v113 = vsel %vm111, %v46, 0
    %115 = vmatprep.subr.bf16.mxu0 %v92
    %116 = vmatpush1.bf16.msra.mxu0 %v91
    %117 = vmatprep.subr.bf16.mxu0 %v97
    %118 = vmatpush1.bf16.msra.mxu0 %v96
    %119 = vmatprep.subr.bf16.mxu0 0
    %120 = vmatpush1.bf16.msra.mxu0 0
    %121 = vmatprep.subr.bf16.mxu0 0
    %122 = vmatpush1.bf16.msra.mxu0 0
    %123 = vmatprep.subr.bf16.mxu0 0
    %124 = vmatpush1.bf16.msra.mxu0 0
    %125 = vmatprep.subr.bf16.mxu0 0
    %126 = vmatpush1.bf16.msra.mxu0 0
    %127 = vmatprep.subr.bf16.mxu0 0
    %128 = vmatpush1.bf16.msra.mxu0 0
    %129 = vmatprep.subr.bf16.mxu0 0
    %130 = vmatpush1.bf16.msra.mxu0 0
    %131 = vmatprep.subr.bf16.mxu0 0
    %132 = vmatpush1.bf16.msra.mxu0 0
    %133 = vmatprep.subr.bf16.mxu0 0
    %134 = vmatpush1.bf16.msra.mxu0 0
    %135 = vmatprep.subr.bf16.mxu0 0
    %136 = vmatpush1.bf16.msra.mxu0 0
    %137 = vmatprep.subr.bf16.mxu0 0
    %138 = vmatpush1.bf16.msra.mxu0 0
    %139 = vmatprep.subr.bf16.mxu0 0
    %140 = vmatpush1.bf16.msra.mxu0 0
    %141 = vmatprep.subr.bf16.mxu0 0
    %142 = vmatpush1.bf16.msra.mxu0 0
    %143 = vmatprep.subr.bf16.mxu0 0
    %144 = vmatpush1.bf16.msra.mxu0 0
    %145 = vmatprep.subr.bf16.mxu0 0
    %146 = vmatpush1.bf16.msra.mxu0 0
    %147 = vmatprep.mubr.bf16.mxu0 0
    %148 = vmatmul.mubr.bf16.gmra.mrb[0].mxu0 %v113
    %v149 = vpop.f32.mrb[0].mxu0
    %v150 = vadd.f32 0.0, %v149
    %v151 = vpop.f32.mrb[0].mxu0
    %v152 = vadd.f32 0.0, %v151
    %v153 = vpop.f32.mrb[0].mxu0
    %v154 = vpop.f32.mrb[0].mxu0
    %155 = vdwg.mxu0
    %156 = vmatprep.subr.bf16.mxu0 %v94
    %157 = vmatpush1.bf16.msra.mxu0 %v93
    %158 = vmatprep.subr.bf16.mxu0 %v99
    %159 = vmatpush1.bf16.msra.mxu0 %v98
    %160 = vmatprep.subr.bf16.mxu0 0
    %161 = vmatpush1.bf16.msra.mxu0 0
    %162 = vmatprep.subr.bf16.mxu0 0
    %163 = vmatpush1.bf16.msra.mxu0 0
    %164 = vmatprep.subr.bf16.mxu0 0
    %165 = vmatpush1.bf16.msra.mxu0 0
    %166 = vmatprep.subr.bf16.mxu0 0
    %167 = vmatpush1.bf16.msra.mxu0 0
    %168 = vmatprep.subr.bf16.mxu0 0
    %169 = vmatpush1.bf16.msra.mxu0 0
    %170 = vmatprep.subr.bf16.mxu0 0
    %171 = vmatpush1.bf16.msra.mxu0 0
    %172 = vmatprep.subr.bf16.mxu0 0
    %173 = vmatpush1.bf16.msra.mxu0 0
    %174 = vmatprep.subr.bf16.mxu0 0
    %175 = vmatpush1.bf16.msra.mxu0 0
    %176 = vmatprep.subr.bf16.mxu0 0
    %177 = vmatpush1.bf16.msra.mxu0 0
    %178 = vmatprep.subr.bf16.mxu0 0
    %179 = vmatpush1.bf16.msra.mxu0 0
    %180 = vmatprep.subr.bf16.mxu0 0
    %181 = vmatpush1.bf16.msra.mxu0 0
    %182 = vmatprep.subr.bf16.mxu0 0
    %183 = vmatpush1.bf16.msra.mxu0 0
    %184 = vmatprep.subr.bf16.mxu0 0
    %185 = vmatpush1.bf16.msra.mxu0 0
    %186 = vmatprep.subr.bf16.mxu0 0
    %187 = vmatpush1.bf16.msra.mxu0 0
    %188 = vmatprep.mubr.bf16.mxu0 0
    %189 = vmatmul.mubr.bf16.gmra.mrb[0].mxu0 %v113
    %v190 = vpop.f32.mrb[0].mxu0
    %v191 = vadd.f32 0.0, %v190
    %v192 = vpop.f32.mrb[0].mxu0
    %v193 = vadd.f32 0.0, %v192
    %v194 = vpop.f32.mrb[0].mxu0
    %v195 = vpop.f32.mrb[0].mxu0
    %196 = vdwg.mxu0
    %197 = vmatprep.subr.bf16.mxu0 0
    %198 = vmatpush1.bf16.msra.mxu0 %v95
    %199 = vmatprep.subr.bf16.mxu0 0
    %200 = vmatpush1.bf16.msra.mxu0 %v100
    %201 = vmatprep.subr.bf16.mxu0 0
    %202 = vmatpush1.bf16.msra.mxu0 0
    %203 = vmatprep.subr.bf16.mxu0 0
    %204 = vmatpush1.bf16.msra.mxu0 0
    %205 = vmatprep.subr.bf16.mxu0 0
    %206 = vmatpush1.bf16.msra.mxu0 0
    %207 = vmatprep.subr.bf16.mxu0 0
    %208 = vmatpush1.bf16.msra.mxu0 0
    %209 = vmatprep.subr.bf16.mxu0 0
    %210 = vmatpush1.bf16.msra.mxu0 0
    %211 = vmatprep.subr.bf16.mxu0 0
    %212 = vmatpush1.bf16.msra.mxu0 0
    %213 = vmatprep.subr.bf16.mxu0 0
    %214 = vmatpush1.bf16.msra.mxu0 0
    %215 = vmatprep.subr.bf16.mxu0 0
    %216 = vmatpush1.bf16.msra.mxu0 0
    %217 = vmatprep.subr.bf16.mxu0 0
    %218 = vmatpush1.bf16.msra.mxu0 0
    %219 = vmatprep.subr.bf16.mxu0 0
    %220 = vmatpush1.bf16.msra.mxu0 0
    %221 = vmatprep.subr.bf16.mxu0 0
    %222 = vmatpush1.bf16.msra.mxu0 0
    %223 = vmatprep.subr.bf16.mxu0 0
    %224 = vmatpush1.bf16.msra.mxu0 0
    %225 = vmatprep.subr.bf16.mxu0 0
    %226 = vmatpush1.bf16.msra.mxu0 0
    %227 = vmatprep.subr.bf16.mxu0 0
    %228 = vmatpush1.bf16.msra.mxu0 0
    %229 = vmatprep.mubr.bf16.mxu0 0
    %230 = vmatmul.mubr.bf16.gmra.mrb[0].mxu0 %v113
    %v231 = vpop.f32.mrb[0].mxu0
    %v232 = vadd.f32 0.0, %v231
    %v233 = vpop.f32.mrb[0].mxu0
    %v234 = vpop.f32.mrb[0].mxu0
    %v235 = vpop.f32.mrb[0].mxu0
    %236 = vdwg.mxu0
    %v237 = vld [vmem:[%s3] sm:$0x1]
    %v239 = vlaneseq
    %v240 = vshrl.u32 %v239, 7
    %v241 = vsub.s32 0, %v240
    %v242 = vrot.slane %v237, %v241
    %v244 = vadd.f32 %v150, %v242
    %s245 = sld [smem:[#allocation2]]
    %v246 = vmax.f32 %v244, 0.0
    %v247 = vstv %s245
    %v248 = vmul.f32 %v247, %v246
    %v249 = vld [vmem:[%s3 + $0x1] sm:$0x1]
    %v251 = vlaneseq
    %v252 = vshrl.u32 %v251, 7
    %v253 = vsub.s32 0, %v252
    %v254 = vrot.slane %v249, %v253
    %v256 = vadd.f32 %v152, %v254
    %s257 = sld [smem:[#allocation2 + $0x1]]
    %v258 = vtanh.pop %v256
    %v259 = vstv %s257
    %v260 = vmul.f32 %v259, %v258
    %v261 = vadd.f32 %v248, %v260
    %v262 = vld [vmem:[%s3 + $0x2] sm:$0x1]
    %v264 = vlaneseq
    %v265 = vshrl.u32 %v264, 7
    %v266 = vsub.s32 0, %v265
    %v267 = vrot.slane %v262, %v266
    %v269 = vadd.f32 %v191, %v267
    %s270 = sld [smem:[#allocation2 + $0x2]]
    %v271 = vmul.f32 %v269, 0.5
    %v272 = vtanh.pop %v271
    %v273 = vadd.f32 %v272, 1.0
    %v274 = vmul.f32 %v273, 0.5
    %v275 = vstv %s270
    %v276 = vmul.f32 %v275, %v274
    %v277 = vadd.f32 %v261, %v276
    %v278 = vld [vmem:[%s3 + $0x3] sm:$0x1]
    %v280 = vlaneseq
    %v281 = vshrl.u32 %v280, 7
    %v282 = vsub.s32 0, %v281
    %v283 = vrot.slane %v278, %v282
    %v285 = vadd.f32 %v193, %v283
    %s286 = sld [smem:[#allocation2 + $0x3]]
    %vm287 = vcmp.ge.f32.partialorder %v285, 0.0
    %v288 = vmul.f32 %v285, 0.2
    %v289 = vsel %vm287, %v285, %v288
    %v290 = vstv %s286
    %v291 = vmul.f32 %v290, %v289
    %v292 = vadd.f32 %v277, %v291
    %v293 = vld [vmem:[%s3 + $0x4] sm:$0x1]
    %v295 = vlaneseq
    %v296 = vshrl.u32 %v295, 7
    %v297 = vsub.s32 0, %v296
    %v298 = vrot.slane %v293, %v297
    %v300 = vadd.f32 %v232, %v298
    %s301 = sld [smem:[#allocation2 + $0x4]]
    %v302 = vstv %s301
    %v303 = vmul.f32 %v302, %v300
    %v304 = vadd.f32 %v292, %v303
    %305 = vst [vmem:[#allocation7] sm:$0xff] %v304
    // Predicated region
    $region26: #{_lambda_.1} parent=1 // pred_check
      _
    $region27: #{_lambda_.1} parent=1 // pred_check_branch
      %307 = sbr.rel (0) target = $region29
    $region28: #{_lambda_.1} parent=1 // pred_region
      %s309 = ssub.s32 128, 128
      %310 = vsyncadd [#allocation4], %s309
      %s312 = sshll.u32 [#allocation7], 4
      %s313 = int_to_ptr.vmem [resolvable:$true] %s312
      %315 = dma.vmem_to_hbm [thread:$0]  %s313, 128, %s4, [#allocation4]
    $region29: #{_lambda_.1} parent=1 // pred_fallthru
      _
    // Predicated region
    $region30: #{_lambda_.1} parent=1 // pred_check
      _
    $region31: #{_lambda_.1} parent=1 // pred_check_branch
      %317 = sbr.rel (0) target = $region33
    $region32: #{_lambda_.1} parent=1 // pred_region
      %318 = dma.done [#allocation4], 128
    $region33: #{_lambda_.1} parent=1 // pred_fallthru
      _
    %319 = vsyncpa [#allocation3], 1
    %320 = vsyncpa [#allocation4], 1
    %321 = vsyncpa [#allocation5], 1

</llo_original>
